<compile_context>
chip_gen: v5e
topology: v5e:2x2
jax: 0.10.0
libtpu: 0.0.40
codegen_flags: <defaults>
</compile_context>

<pallas_src>
import functools

import numpy as np
import jax
import jax.numpy as jnp
from jax.experimental import pallas as pl
from jax.experimental.pallas import tpu as pltpu

_VMEM_LIMIT_BYTES = 32 * 1024 * 1024   # safe scoped-VMEM ceiling on v5e/v6e/v7x
_TILE_BUDGET_BYTES = 6 * 1024 * 1024   # per-stage working-set budget for tiling


def _round_up(x, m):
    return ((x + m - 1) // m) * m


# ----------------------------------------------------------------------------
# Kernel 1: fused  conv1x1(no bias) + BN affine + ReLU + channel-mix (C -> 1)
#           [+ bias + sigmoid when the upsample is the identity (scale == 1)]
# ----------------------------------------------------------------------------
def _fused_kernel(apply_out, x_ref, w1_ref, b1_ref, w2_ref, b2_ref, o_ref):
    # x_ref : (1, C, T)  (input dtype)    w1_ref: (C, C) (input dtype)
    # b1_ref: (C, 1) f32                  w2_ref: (1, C) f32
    # b2_ref: SMEM (1,) f32               o_ref : (1, 1, T) f32
    y = jnp.dot(w1_ref[...], x_ref[0], preferred_element_type=jnp.float32)  # (C, T)
    y = jnp.maximum(y + b1_ref[...], 0.0)                                   # BN + ReLU (f32)
    s = jnp.dot(w2_ref[...], y, preferred_element_type=jnp.float32)         # (1, T)
    if apply_out:                                  # static Python bool (scale == 1)
        # exact sigmoid (exp runs on the EUP; the divide is negligible here)
        s = 1.0 / (1.0 + jnp.exp(-(s + b2_ref[0])))
    o_ref[0] = s


def _pick_hw_tile(hw, c, in_itemsize):
    # Per output pixel (per lane) VMEM cost of one pipeline stage:
    #   2 * C * itemsize   double-buffered x tile
    #   C * 4              f32 intermediate y
    #   2 * 4              double-buffered f32 output tile
    per_elem = 2 * c * in_itemsize + 4 * c + 8
    t = _TILE_BUDGET_BYTES // per_elem
    t = max(128, (min(t, 16384) // 128) * 128)     # 128-lane aligned, capped
    return min(t, _round_up(hw, 128))              # never exceed (padded) HW


def fused_proj(x_chw, w_eff, b_eff, w2, b2, *, apply_out):
    """x_chw: (B, C, HW) f32 or bf16. Returns (B, 1, HW) f32."""
    B, C, HW = x_chw.shape
    T = _pick_hw_tile(HW, C, x_chw.dtype.itemsize)
    grid = (B, pl.cdiv(HW, T))
    kern = functools.partial(_fused_kernel, apply_out)
    return pl.pallas_call(
        kern,
        out_shape=jax.ShapeDtypeStruct((B, 1, HW), jnp.float32),
        grid=grid,
        in_specs=[
            pl.BlockSpec((1, C, T), lambda b, t: (b, 0, t)),
            pl.BlockSpec((C, C), lambda b, t: (0, 0)),
            pl.BlockSpec((C, 1), lambda b, t: (0, 0)),
            pl.BlockSpec((1, C), lambda b, t: (0, 0)),
            pl.BlockSpec(memory_space=pltpu.MemorySpace.SMEM),
        ],
        out_specs=pl.BlockSpec((1, 1, T), lambda b, t: (b, 0, t)),
        compiler_params=pltpu.CompilerParams(
            dimension_semantics=("parallel", "parallel"),
            vmem_limit_bytes=_VMEM_LIMIT_BYTES),
    )(x_chw, w_eff.astype(x_chw.dtype), b_eff, w2, b2)


# ----------------------------------------------------------------------------
# Kernel 2 (scale > 1): bilinear upsample (align_corners=True) + bias + sigmoid
#   out[b] = sigmoid( UH @ s[b] @ UW^T + b2 ),  tiled over output rows.
# ----------------------------------------------------------------------------
def _upsample_kernel(s_ref, uh_ref, uwt_ref, b2_ref, o_ref):
    # s_ref: (1, H, W)  uh_ref: (tHo, H)  uwt_ref: (W, Wo)  o_ref: (1, tHo, Wo)
    tmp = jnp.dot(uh_ref[...], s_ref[0], preferred_element_type=jnp.float32)   # (tHo, W)
    up = jnp.dot(tmp, uwt_ref[...], preferred_element_type=jnp.float32)        # (tHo, Wo)
    o_ref[0] = 1.0 / (1.0 + jnp.exp(-(up + b2_ref[0])))


def _pick_row_tile(Ho, H, W, Wo):
    # Resident per batch: s (H,W) f32 + uwt (W,Wo) f32.
    fixed = 4 * (H * W + W * Wo)
    # Per output row: double-buffered out + f32 tmp row + double-buffered uh row.
    per_row = 4 * (2 * Wo + W + 2 * H)
    t = max(8, (_TILE_BUDGET_BYTES - fixed) // per_row)
    t = (min(t, Ho) // 8) * 8                      # sublane-aligned
    if t <= 0 or t >= Ho:
        return Ho                                  # full-extent block is always legal
    return t


def upsample_sigmoid(s_bhw, uh, uwt, b2):
    """s_bhw: (B, H, W); uh: (Ho, H); uwt: (W, Wo). Returns (B, Ho, Wo) f32."""
    B, H, W = s_bhw.shape
    Ho, Wo = uh.shape[0], uwt.shape[1]
    tHo = _pick_row_tile(Ho, H, W, Wo)
    grid = (B, pl.cdiv(Ho, tHo))                   # row-tile axis last: s stays resident
    return pl.pallas_call(
        _upsample_kernel,
        out_shape=jax.ShapeDtypeStruct((B, Ho, Wo), jnp.float32),
        grid=grid,
        in_specs=[
            pl.BlockSpec((1, H, W), lambda b, i: (b, 0, 0)),
            pl.BlockSpec((tHo, H), lambda b, i: (i, 0)),
            pl.BlockSpec((W, Wo), lambda b, i: (0, 0)),
            pl.BlockSpec(memory_space=pltpu.MemorySpace.SMEM),
        ],
        out_specs=pl.BlockSpec((1, tHo, Wo), lambda b, i: (b, i, 0)),
        compiler_params=pltpu.CompilerParams(
            dimension_semantics=("parallel", "parallel"),
            vmem_limit_bytes=_VMEM_LIMIT_BYTES),
    )(s_bhw, uh, uwt, b2)


# ----------------------------------------------------------------------------
# Interpolation matrix for align_corners=True bilinear (UpsamplingBilinear2d).
# Rows sum to 1, which is what makes moving the conv2 bias after the upsample
# (and commuting the channel mix ahead of it) exact.
# ----------------------------------------------------------------------------
def _interp_matrix(n_out, n_in):
    m = np.zeros((n_out, n_in), np.float32)
    if n_out == 1 or n_in == 1:
        m[:, 0] = 1.0
        return jnp.asarray(m)
    src = np.arange(n_out, dtype=np.float64) * (n_in - 1) / (n_out - 1)
    lo = np.clip(np.floor(src).astype(np.int64), 0, n_in - 2)
    frac = (src - lo).astype(np.float32)
    m[np.arange(n_out), lo] = 1.0 - frac
    m[np.arange(n_out), lo + 1] = frac
    return jnp.asarray(m)


# ----------------------------------------------------------------------------
# Full forward (wrapper): NCHW in -> (B, 1, H*scale, W*scale) out
# ----------------------------------------------------------------------------
def output_forward(x_nchw, params, scale=1):
    B, C, H, W = x_nchw.shape
    eps = 1e-5

    # Fold eval-mode BatchNorm into the (bias-free) 1x1 conv.
    g = params["bn_gamma"] / jnp.sqrt(params["bn_var"] + eps)        # (C,)
    w_eff = g[:, None] * params["w1"]                                # (C, C)
    b_eff = (params["bn_beta"] - params["bn_mean"] * g)[:, None]     # (C, 1) f32
    w2 = params["w2"].reshape(1, C).astype(jnp.float32)              # (1, C)
    b2 = params["b2"].reshape(1).astype(jnp.float32)                 # (1,)

    x_chw = x_nchw.reshape(B, C, H * W)                              # free reshape (NCHW)

    if scale == 1:
        # UpsamplingBilinear2d(scale_factor=1) is the identity -> fully fused.
        out = fused_proj(x_chw, w_eff, b_eff, w2, b2, apply_out=True)  # (B, 1, HW)
        return out.reshape(B, 1, H, W)

    # scale > 1: channel mix first (valid: upsample and 1x1 conv commute),
    # then 1-channel bilinear upsample + bias + sigmoid.
    s = fused_proj(x_chw, w_eff, b_eff, w2, b2, apply_out=False)       # (B, 1, HW)
    s = s.reshape(B, H, W)
    Ho, Wo = H * scale, W * scale
    uh = _interp_matrix(Ho, H)                                         # (Ho, H)
    uwt = _interp_matrix(Wo, W).T                                      # (W, Wo)
    out = upsample_sigmoid(s, uh, uwt, b2)                             # (B, Ho, Wo)
    return out.reshape(B, 1, Ho, Wo)


# ----------------------------------------------------------------------------
# Pure-JAX reference (mirrors the PyTorch forward, eval-mode BN), NCHW
# ----------------------------------------------------------------------------
def output_reference(x, p, scale=1):
    B, C, H, W = x.shape
    eps = 1e-5
    y = jnp.einsum("bchw,oc->bohw", x, p["w1"])                        # conv 1x1, no bias
    y = ((y - p["bn_mean"][None, :, None, None])
         * (p["bn_gamma"] / jnp.sqrt(p["bn_var"] + eps))[None, :, None, None]
         + p["bn_beta"][None, :, None, None])                          # BatchNorm (eval)
    y = jnp.maximum(y, 0.0)                                            # ReLU
    if scale != 1:                                                     # bilinear, align_corners=True
        uh = _interp_matrix(H * scale, H)
        uw = _interp_matrix(W * scale, W)
        y = jnp.einsum("oh,bchw,pw->bcop", uh, y, uw)
    z = jnp.einsum("bchw,oc->bohw", y, p["w2"].reshape(1, C)) \
        + p["b2"].reshape(1)[None, :, None, None]                      # conv 1x1 -> 1 ch
    return 1.0 / (1.0 + jnp.exp(-z))                                   # sigmoid


# ----------------------------------------------------------------------------
# Deterministic parameter init (shapes per the module's __init__)
# ----------------------------------------------------------------------------
def init_params(key, C):
    ks = jax.random.split(key, 8)

    def kaiming(k, shape, fan_in):
        return ((2.0 / fan_in) ** 0.5) * jax.random.normal(k, shape, jnp.float32)

    return {
        "w1": kaiming(ks[0], (C, C), C),                                   # Conv2d(C,C,1,bias=False)
        "bn_gamma": 1.0 + 0.1 * jax.random.normal(ks[1], (C,), jnp.float32),
        "bn_beta": 0.1 * jax.random.normal(ks[2], (C,), jnp.float32),
        "bn_mean": 0.1 * jax.random.normal(ks[3], (C,), jnp.float32),
        "bn_var": jnp.abs(1.0 + 0.1 * jax.random.normal(ks[4], (C,), jnp.float32)),
        "w2": kaiming(ks[5], (1, C), C),                                   # Conv2d(C,1,1)
        "b2": 0.05 * jax.random.normal(ks[6], (1,), jnp.float32),
    }


if __name__ == "__main__":
    B, C, H, W = 2, 16, 16, 16

    key = jax.random.PRNGKey(0)
    kx, kp = jax.random.split(key)
    x = jax.random.normal(kx, (B, C, H, W), jnp.float32)   # NCHW, like PyTorch
    params = init_params(kp, C)

    # f32 path: strict check against the JAX reference.
    for scale in (1, 2):
        out = jax.block_until_ready(output_forward(x, params, scale))
        ref = jax.block_until_ready(output_reference(x, params, scale))
        assert out.shape == (B, 1, H * scale, W * scale), out.shape
        err = float(jnp.max(jnp.abs(out - ref)))
        if not err < 1e-4:
            raise AssertionError(
                f"Pallas output mismatch vs JAX reference (scale={scale}): max abs err = {err}")

    # bf16 activation path (halves HBM read traffic for kernel 1); loose tolerance.
    out_bf16 = jax.block_until_ready(
        output_forward(x.astype(jnp.bfloat16), params, 2))
    ref = jax.block_until_ready(output_reference(x, params, 2))
    err_bf16 = float(jnp.max(jnp.abs(out_bf16 - ref)))
    if not err_bf16 < 5e-2:
        raise AssertionError(
            f"bf16 Pallas output mismatch vs f32 reference: max abs err = {err_bf16}")

    print("KERNEL_OK")
</pallas_src>

<mosaic_0001>
module attributes {stable_mosaic.version = 11 : i64} {
  func.func @_fused_kernel(%arg0: i32, %arg1: i32, %arg2: memref<1x16x256xf32, #tpu.memory_space<vmem>>, %arg3: memref<16x16xf32, #tpu.memory_space<vmem>>, %arg4: memref<16x1xf32, #tpu.memory_space<vmem>>, %arg5: memref<1x16xf32, #tpu.memory_space<vmem>>, %arg6: memref<1xf32, #tpu.memory_space<smem>>, %arg7: memref<1x1x256xf32, #tpu.memory_space<vmem>>) attributes {dimension_semantics = [#tpu.dimension_semantics<parallel>, #tpu.dimension_semantics<parallel>], iteration_bounds = array<i64: 2, 1>, scalar_prefetch = 0 : i64, scratch_operands = 0 : i64, tpu.core_type = #tpu.core_type<tc>, window_params = [{transform_indices = @transform_0, window_bounds = array<i64: 1, 16, 256>}, {pipeline_mode = #tpu.pipeline_mode<synchronous>, transform_indices = @transform_1, window_bounds = array<i64: 16, 16>}, {pipeline_mode = #tpu.pipeline_mode<synchronous>, transform_indices = @transform_2, window_bounds = array<i64: 16, 1>}, {pipeline_mode = #tpu.pipeline_mode<synchronous>, transform_indices = @transform_3, window_bounds = array<i64: 1, 16>}, {transform_indices = @transform_4, window_bounds = array<i64: 1>}, {transform_indices = @transform_5, window_bounds = array<i64: 1, 1, 256>}]} {
    %c0 = arith.constant 0 : index
    %c0_0 = arith.constant 0 : index
    %0 = vector.load %arg3[%c0, %c0_0] : memref<16x16xf32, #tpu.memory_space<vmem>>, vector<16x16xf32>
    %c0_1 = arith.constant 0 : index
    %c0_2 = arith.constant 0 : index
    %c0_3 = arith.constant 0 : index
    %1 = vector.load %arg2[%c0_1, %c0_2, %c0_3] : memref<1x16x256xf32, #tpu.memory_space<vmem>>, vector<1x16x256xf32>
    %2 = vector.shape_cast %1 : vector<1x16x256xf32> to vector<16x256xf32>
    %cst = arith.constant dense<0.000000e+00> : vector<16x256xf32>
    %3 = tpu.matmul %0, %2, %cst {dimension_numbers = #tpu.dot_dimension_numbers<[1], [0], [0], [1], [0, 0, 1, 1], [], []>} : vector<16x16xf32>, vector<16x256xf32>, vector<16x256xf32> -> vector<16x256xf32>
    %c0_4 = arith.constant 0 : index
    %c0_5 = arith.constant 0 : index
    %4 = vector.load %arg4[%c0_4, %c0_5] : memref<16x1xf32, #tpu.memory_space<vmem>>, vector<16x1xf32>
    %5 = vector.broadcast %4 : vector<16x1xf32> to vector<16x256xf32>
    %6 = arith.addf %3, %5 : vector<16x256xf32>
    %cst_6 = arith.constant 0.000000e+00 : f32
    %7 = vector.broadcast %cst_6 : f32 to vector<16x256xf32>
    %8 = arith.maximumf %6, %7 : vector<16x256xf32>
    %c0_7 = arith.constant 0 : index
    %c0_8 = arith.constant 0 : index
    %9 = vector.load %arg5[%c0_7, %c0_8] : memref<1x16xf32, #tpu.memory_space<vmem>>, vector<1x16xf32>
    %cst_9 = arith.constant dense<0.000000e+00> : vector<1x256xf32>
    %10 = tpu.matmul %9, %8, %cst_9 {dimension_numbers = #tpu.dot_dimension_numbers<[1], [0], [0], [1], [0, 0, 1, 1], [], []>} : vector<1x16xf32>, vector<16x256xf32>, vector<1x256xf32> -> vector<1x256xf32>
    %c0_10 = arith.constant 0 : index
    %11 = memref.load %arg6[%c0_10] : memref<1xf32, #tpu.memory_space<smem>>
    %12 = vector.broadcast %11 : f32 to vector<1x256xf32>
    %13 = arith.addf %10, %12 : vector<1x256xf32>
    %cst_11 = arith.constant 0.000000e+00 : f32
    %14 = vector.broadcast %cst_11 : f32 to vector<1x256xf32>
    %15 = arith.subf %14, %13 : vector<1x256xf32>
    %16 = math.exp %15 : vector<1x256xf32>
    %cst_12 = arith.constant 1.000000e+00 : f32
    %17 = vector.broadcast %cst_12 : f32 to vector<1x256xf32>
    %18 = arith.addf %17, %16 : vector<1x256xf32>
    %cst_13 = arith.constant 1.000000e+00 : f32
    %19 = vector.broadcast %cst_13 : f32 to vector<1x256xf32>
    %20 = arith.divf %19, %18 : vector<1x256xf32>
    %c0_14 = arith.constant 0 : index
    %c0_15 = arith.constant 0 : index
    %c0_16 = arith.constant 0 : index
    %21 = vector.load %arg7[%c0_14, %c0_15, %c0_16] : memref<1x1x256xf32, #tpu.memory_space<vmem>>, vector<1x1x256xf32>
    %22 = vector.shape_cast %21 : vector<1x1x256xf32> to vector<1x256xf32>
    %23 = vector.shape_cast %20 : vector<1x256xf32> to vector<1x1x256xf32>
    tpu.vector_store %arg7[%c0_14, %c0_15, %c0_16], %23 {strides = array<i32>} : memref<1x1x256xf32, #tpu.memory_space<vmem>>, vector<1x1x256xf32>,
    return
  }
  func.func @transform_0(%arg0: i32, %arg1: i32) -> (i32, i32, i32) {
    %c0_i32 = arith.constant 0 : i32
    %c0_i32_0 = arith.constant 0 : i32
    return %arg0, %c0_i32, %arg1 : i32, i32, i32
  }
  func.func @transform_1(%arg0: i32, %arg1: i32) -> (i32, i32) {
    %c0_i32 = arith.constant 0 : i32
    %c0_i32_0 = arith.constant 0 : i32
    %c0_i32_1 = arith.constant 0 : i32
    return %c0_i32, %c0_i32_0 : i32, i32
  }
  func.func @transform_2(%arg0: i32, %arg1: i32) -> (i32, i32) {
    %c0_i32 = arith.constant 0 : i32
    %c0_i32_0 = arith.constant 0 : i32
    %c0_i32_1 = arith.constant 0 : i32
    return %c0_i32, %c0_i32_0 : i32, i32
  }
  func.func @transform_3(%arg0: i32, %arg1: i32) -> (i32, i32) {
    %c0_i32 = arith.constant 0 : i32
    %c0_i32_0 = arith.constant 0 : i32
    %c0_i32_1 = arith.constant 0 : i32
    return %c0_i32, %c0_i32_0 : i32, i32
  }
  func.func @transform_4(%arg0: i32, %arg1: i32) -> i32 {
    %c0_i32 = arith.constant 0 : i32
    %c0_i32_0 = arith.constant 0 : i32
    return %c0_i32 : i32
  }
  func.func @transform_5(%arg0: i32, %arg1: i32) -> (i32, i32, i32) {
    %c0_i32 = arith.constant 0 : i32
    %c0_i32_0 = arith.constant 0 : i32
    return %arg0, %c0_i32, %arg1 : i32, i32, i32
  }
}

</mosaic_0001>

<llo_original>
// kernel: tpu_custom_call.1
$region0: #{tpu_custom_call.1}
  #allocation0 [shape = 'u32[]', space=smem, size = 0x4, offset = 0x4, fixed_abs, tag = 'smem constant byte address 0x4 - core index']
  #allocation1 [shape = 'u32[72,128]{1,0:T(1,128)}', space=vmem, size = 0x9000, scoped, tag = 'internal scratch']
  #allocation2 [shape = 'f32[1]{0:T(128)S(6)}', space=smem, size = 0x200, scoped, tag = 'scoped memory for tpu_custom_call.1']
  %s0 = inlined_call_operand.hbm [shape: f32[2,16,256], index: 0, kind: input, shape index: {}]
  %s1 = inlined_call_operand.vmem [shape: f32[16,16], index: 1, kind: input, shape index: {}]
  %s2 = inlined_call_operand.vmem [shape: f32[16,1], index: 2, kind: input, shape index: {}]
  %s3 = inlined_call_operand.vmem [shape: f32[1,16], index: 3, kind: input, shape index: {}]
  %s4 = inlined_call_operand.<no memory space> [shape: f32[1], index: 4, kind: input, shape index: {}]
  %s5 = inlined_call_operand.hbm [shape: f32[2,1,256], index: 5, kind: output, shape index: {}]
  %s6 = sld [smem:[#allocation0]]
  $region57: #{tpu_custom_call.1} parent=0
    _
  %s8 = ssub.s32 1, %s6
  %s9 = scalar_select 0, %s8, %s6
  %10 = sst [smem:[#allocation2]] %s4
  $region1: #{tpu_custom_call.1} parent=0
    #allocation3 [shape = 'u8[32768]{0}', space=vmem, size = 0x8000, scoped, tag = 'input window, operand 0']
    #allocation4 [shape = 's32[2]{0}', space=sflag, size = 0x8, scoped, tag = 'scoped memory for tpu_custom_call.1']
    #allocation5 [shape = 's32[2]{0}', space=sflag, size = 0x8, scoped, tag = 'scoped memory for tpu_custom_call.1']
    #allocation6 [shape = 'u8[2048]{0}', space=vmem, size = 0x800, scoped, tag = 'output window, operand 0']
    %11 = vsyncpa [#allocation4], 0
    %s12 = scalar_lea.sflag [#allocation4], 1
    %13 = vsyncpa %s12, 0
    %14 = vsyncpa [#allocation5], 0
    %s15 = scalar_lea.sflag [#allocation5], 1
    %16 = vsyncpa %s15, 0
    loop: start=0, step=1, limit=4
    $region2: #{tpu_custom_call.1} parent=1 // loop_pre_header
      _
    $region3: #{tpu_custom_call.1} parent=1 // loop_header
      %s18 = sphi 0, %s22
      %p19 = scmp.ge.s32.totalorder %s18, 4
      %s25 = sphi 0, %s37
      %s26 = sphi 0, %s33
      %s27 = sphi 0, %s25
      %s28 = sphi 0, %s26
      %s29 = sphi 0, %s27
      %s30 = sphi 0, %s28
      %s42 = sphi 0, %s44
      %s45 = sphi 0, %s42
      %s46 = sphi 0, %s45
      %s62 = sphi 0, %s46
      %s66 = sphi 0, %s66
      %s68 = sphi 0, %s66
      %s69 = sphi 0, %s68
      %s83 = sphi 0, %s69
      %s87 = sphi 0, %s87
      %s89 = sphi 0, %s87
      %s90 = sphi 0, %s89
      %s104 = sphi 0, %s90
      %s108 = sphi 0, %s108
      %s110 = sphi 0, %s108
      %s111 = sphi 0, %s110
      %s125 = sphi 0, %s111
      %s129 = sphi 0, %s129
      %s131 = sphi 0, %s129
      %s132 = sphi 0, %s131
      %s146 = sphi 0, %s132
      %s154 = sphi 0, %s156
      %s157 = sphi 0, %s154
      %s158 = sphi 0, %s157
      %s174 = sphi 0, %s158
    $region4: #{tpu_custom_call.1} parent=1 // loop_header_branch
      %21 = sbr.rel (%p19) target = $region8
    $region5: #{tpu_custom_call.1} parent=1 // loop_body
      %s23 = ssub.s32 %s18, 1
      %s24 = ssub.s32 %s18, 2
      %s31 = sadd.s32 1, %s26
      %p32 = scmp.ge.s32.totalorder %s31, 1
      %s33 = scalar_select %p32, 0, %s31
      %s34 = sadd.s32 1, %s25
      %s35 = scalar_select %p32, %s34, %s25
      %p36 = scmp.ge.s32.totalorder %s35, 2
      %s37 = scalar_select %p36, 0, %s35
      %s38 = ssub.s32 %s25, %s37
      %s39 = ssub.s32 %s26, %s33
      %s40 = sor.u32 %s38, %s39
      %p41 = scmp.eq.s32.totalorder %s40, 0
      %s43 = sadd.s32 %s42, 1
      %s44 = scalar_select %p41, %s42, %s43
      %p47 = pneg %p41
      %p48 = scmp.eq.s32.totalorder %s18, 1
      %p49 = por %p47, %p48
      %p50 = scmp.ne.s32.totalorder %s42, %s45
      %p51 = scmp.eq.s32.totalorder %s18, 0
      %p52 = por %p50, %p51
      %p53 = scmp.ne.s32.totalorder %s42, %s45
      %p54 = scmp.eq.s32.totalorder %s23, 1
      %p55 = por %p53, %p54
      %p56 = scmp.ne.s32.totalorder %s45, %s46
      %p57 = scmp.eq.s32.totalorder %s23, 0
      %p58 = por %p56, %p57
      %p59 = scmp.ne.s32.totalorder %s45, %s46
      %p60 = scmp.eq.s32.totalorder %s24, 1
      %p61 = por %p59, %p60
      %p63 = scmp.ne.s32.totalorder %s46, %s62
      %p64 = scmp.eq.s32.totalorder %s24, 0
      %p65 = por %p63, %p64
      %s67 = sadd.s32 %s66, 1
      %p70 = scmp.eq.s32.totalorder %s18, 1
      %p71 = scmp.ne.s32.totalorder %s66, %s68
      %p72 = scmp.eq.s32.totalorder %s18, 0
      %p73 = por %p71, %p72
      %p74 = scmp.ne.s32.totalorder %s66, %s68
      %p75 = scmp.eq.s32.totalorder %s23, 1
      %p76 = por %p74, %p75
      %p77 = scmp.ne.s32.totalorder %s68, %s69
      %p78 = scmp.eq.s32.totalorder %s23, 0
      %p79 = por %p77, %p78
      %p80 = scmp.ne.s32.totalorder %s68, %s69
      %p81 = scmp.eq.s32.totalorder %s24, 1
      %p82 = por %p80, %p81
      %p84 = scmp.ne.s32.totalorder %s69, %s83
      %p85 = scmp.eq.s32.totalorder %s24, 0
      %p86 = por %p84, %p85
      %s88 = sadd.s32 %s87, 1
      %p91 = scmp.eq.s32.totalorder %s18, 1
      %p92 = scmp.ne.s32.totalorder %s87, %s89
      %p93 = scmp.eq.s32.totalorder %s18, 0
      %p94 = por %p92, %p93
      %p95 = scmp.ne.s32.totalorder %s87, %s89
      %p96 = scmp.eq.s32.totalorder %s23, 1
      %p97 = por %p95, %p96
      %p98 = scmp.ne.s32.totalorder %s89, %s90
      %p99 = scmp.eq.s32.totalorder %s23, 0
      %p100 = por %p98, %p99
      %p101 = scmp.ne.s32.totalorder %s89, %s90
      %p102 = scmp.eq.s32.totalorder %s24, 1
      %p103 = por %p101, %p102
      %p105 = scmp.ne.s32.totalorder %s90, %s104
      %p106 = scmp.eq.s32.totalorder %s24, 0
      %p107 = por %p105, %p106
      %s109 = sadd.s32 %s108, 1
      %p112 = scmp.eq.s32.totalorder %s18, 1
      %p113 = scmp.ne.s32.totalorder %s108, %s110
      %p114 = scmp.eq.s32.totalorder %s18, 0
      %p115 = por %p113, %p114
      %p116 = scmp.ne.s32.totalorder %s108, %s110
      %p117 = scmp.eq.s32.totalorder %s23, 1
      %p118 = por %p116, %p117
      %p119 = scmp.ne.s32.totalorder %s110, %s111
      %p120 = scmp.eq.s32.totalorder %s23, 0
      %p121 = por %p119, %p120
      %p122 = scmp.ne.s32.totalorder %s110, %s111
      %p123 = scmp.eq.s32.totalorder %s24, 1
      %p124 = por %p122, %p123
      %p126 = scmp.ne.s32.totalorder %s111, %s125
      %p127 = scmp.eq.s32.totalorder %s24, 0
      %p128 = por %p126, %p127
      %s130 = sadd.s32 %s129, 1
      %p133 = scmp.eq.s32.totalorder %s18, 1
      %p134 = scmp.ne.s32.totalorder %s129, %s131
      %p135 = scmp.eq.s32.totalorder %s18, 0
      %p136 = por %p134, %p135
      %p137 = scmp.ne.s32.totalorder %s129, %s131
      %p138 = scmp.eq.s32.totalorder %s23, 1
      %p139 = por %p137, %p138
      %p140 = scmp.ne.s32.totalorder %s131, %s132
      %p141 = scmp.eq.s32.totalorder %s23, 0
      %p142 = por %p140, %p141
      %p143 = scmp.ne.s32.totalorder %s131, %s132
      %p144 = scmp.eq.s32.totalorder %s24, 1
      %p145 = por %p143, %p144
      %p147 = scmp.ne.s32.totalorder %s132, %s146
      %p148 = scmp.eq.s32.totalorder %s24, 0
      %p149 = por %p147, %p148
      %s150 = ssub.s32 %s25, %s37
      %s151 = ssub.s32 %s26, %s33
      %s152 = sor.u32 %s150, %s151
      %p153 = scmp.eq.s32.totalorder %s152, 0
      %s155 = sadd.s32 %s154, 1
      %s156 = scalar_select %p153, %s154, %s155
      %p159 = pneg %p153
      %p160 = scmp.eq.s32.totalorder %s18, 1
      %p161 = por %p159, %p160
      %p162 = scmp.ne.s32.totalorder %s154, %s157
      %p163 = scmp.eq.s32.totalorder %s18, 0
      %p164 = por %p162, %p163
      %p165 = scmp.ne.s32.totalorder %s154, %s157
      %p166 = scmp.eq.s32.totalorder %s23, 1
      %p167 = por %p165, %p166
      %p168 = scmp.ne.s32.totalorder %s157, %s158
      %p169 = scmp.eq.s32.totalorder %s23, 0
      %p170 = por %p168, %p169
      %p171 = scmp.ne.s32.totalorder %s157, %s158
      %p172 = scmp.eq.s32.totalorder %s24, 1
      %p173 = por %p171, %p172
      %p175 = scmp.ne.s32.totalorder %s158, %s174
      %p176 = scmp.eq.s32.totalorder %s24, 0
      %p177 = por %p175, %p176
      %p178 = scmp.le.s32.totalorder 1, %s18
      %p179 = scmp.lt.s32.totalorder %s18, 3
      %p180 = pnand %p178, %p179
      %p181 = pneg %p180
      // Predicated region
      $region9: #{tpu_custom_call.1} parent=5 // pred_check
        _
      $region10: #{tpu_custom_call.1} parent=5 // pred_check_branch
        %183 = sbr.rel (%p180) target = $region12
      $region11: #{tpu_custom_call.1} parent=5 // pred_region
        %s184 = ssub.s32 %s18, 1
        // Predicated region
        $region13: #{tpu_custom_call.1} parent=11 // pred_check
          %p185 = pneg %p79
        $region14: #{tpu_custom_call.1} parent=11 // pred_check_branch
          %187 = sbr.rel (%p185) target = $region16
        $region15: #{tpu_custom_call.1} parent=11 // pred_region
          _
        $region16: #{tpu_custom_call.1} parent=11 // pred_fallthru
          _
        // Predicated region
        $region17: #{tpu_custom_call.1} parent=11 // pred_check
          %p188 = pneg %p100
        $region18: #{tpu_custom_call.1} parent=11 // pred_check_branch
          %190 = sbr.rel (%p188) target = $region20
        $region19: #{tpu_custom_call.1} parent=11 // pred_region
          _
        $region20: #{tpu_custom_call.1} parent=11 // pred_fallthru
          _
        // Predicated region
        $region21: #{tpu_custom_call.1} parent=11 // pred_check
          %p191 = pneg %p121
        $region22: #{tpu_custom_call.1} parent=11 // pred_check_branch
          %193 = sbr.rel (%p191) target = $region24
        $region23: #{tpu_custom_call.1} parent=11 // pred_region
          _
        $region24: #{tpu_custom_call.1} parent=11 // pred_fallthru
          _
        // Predicated region
        $region25: #{tpu_custom_call.1} parent=11 // pred_check
          %p194 = pneg %p142
        $region26: #{tpu_custom_call.1} parent=11 // pred_check_branch
          %196 = sbr.rel (%p194) target = $region28
        $region27: #{tpu_custom_call.1} parent=11 // pred_region
          _
        $region28: #{tpu_custom_call.1} parent=11 // pred_fallthru
          _
      $region12: #{tpu_custom_call.1} parent=5 // pred_fallthru
        _
      %p197 = scmp.lt.s32.totalorder %s18, 2
      // Predicated region
      $region29: #{tpu_custom_call.1} parent=5 // pred_check
        %p198 = pneg %p197
      $region30: #{tpu_custom_call.1} parent=5 // pred_check_branch
        %200 = sbr.rel (%p198) target = $region32
      $region31: #{tpu_custom_call.1} parent=5 // pred_region
        // Predicated region
        $region33: #{tpu_custom_call.1} parent=31 // pred_check
          %p201 = pneg %p52
        $region34: #{tpu_custom_call.1} parent=31 // pred_check_branch
          %203 = sbr.rel (%p201) target = $region36
        $region35: #{tpu_custom_call.1} parent=31 // pred_region
          %s204 = sand.u32 %s42, 1
          %s205 = scalar_lea.sflag [#allocation4], %s204
          %s206 = sand.u32 %s42, 1
          %s207 = smul.addr %s206, 32
          %s208 = scalar_lea.vmem [#allocation3], %s207
          %s209 = smul.u32 2, %s26
          %211 = vsyncadd %s205, 0
          %s212 = smul.addr %s25, 4
          %s213 = sadd.s32 %s209, %s212
          %s214 = smul.addr %s213, 8
          %s215 = scalar_lea.hbm %s0, %s214
          %s216 = sshll.u32 %s215, 4
          %s217 = int_to_ptr.hbm [resolvable:$true] %s216
          %s218 = sshll.u32 %s208, 4
          %s219 = int_to_ptr.vmem [resolvable:$true] %s218
          %224 = dma.hbm_to_vmem [thread:$0]  %s217, 512, %s219, %s205, 256, 256, 16
        $region36: #{tpu_custom_call.1} parent=31 // pred_fallthru
          _
      $region32: #{tpu_custom_call.1} parent=5 // pred_fallthru
        _
      %p225 = scmp.le.s32.totalorder 1, %s18
      %p226 = scmp.lt.s32.totalorder %s18, 3
      %p227 = pnand %p225, %p226
      %p228 = pneg %p227
      // Predicated region
      $region37: #{tpu_custom_call.1} parent=5 // pred_check
        _
      $region38: #{tpu_custom_call.1} parent=5 // pred_check_branch
        %230 = sbr.rel (%p227) target = $region40
      $region39: #{tpu_custom_call.1} parent=5 // pred_region
        %s231 = ssub.s32 %s18, 1
        %s232 = sand.u32 %s45, 1
        %s233 = scalar_lea.sflag [#allocation4], %s232
        %s234 = sand.u32 %s45, 1
        %s235 = smul.addr %s234, 32
        %s236 = scalar_lea.vmem [#allocation3], %s235
        // Predicated region
        $region41: #{tpu_custom_call.1} parent=39 // pred_check
          %p237 = pneg %p58
        $region42: #{tpu_custom_call.1} parent=39 // pred_check_branch
          %239 = sbr.rel (%p237) target = $region44
        $region43: #{tpu_custom_call.1} parent=39 // pred_region
          %241 = dma.done %s233, 512
        $region44: #{tpu_custom_call.1} parent=39 // pred_fallthru
          _
        %s242 = sand.u32 %s45, 1
        %s243 = scalar_lea.sflag [#allocation4], %s242
        %s244 = sand.u32 %s45, 1
        %s245 = smul.addr %s244, 32
        %s246 = scalar_lea.vmem [#allocation3], %s245
        %p247 = pneg %p58
        %p248 = pneg %p55
        %p249 = pneg %p79
        %p250 = pneg %p76
        %p251 = pneg %p100
        %p252 = pneg %p97
        %p253 = pneg %p121
        %p254 = pneg %p118
        %p255 = pneg %p142
        %p256 = pneg %p139
        %p257 = pneg %p170
        %p258 = pneg %p167
        %s259 = sand.u32 %s157, 1
        %s260 = scalar_lea.sflag [#allocation5], %s259
        %s261 = sand.u32 %s157, 1
        %s262 = smul.addr %s261, 2
        %s263 = scalar_lea.vmem [#allocation6], %s262
        %s264 = smul.u32 2, %s28
        %s265 = smul.u32 2, %s28
        %v266 = vld [vmem:[%s1] sm:$0xff]
        %v267 = vld [vmem:[%s1 + $0x8] sm:$0xff]
        %v268 = vld [vmem:[%s236] sm:$0xff]
        %v269 = vld [vmem:[%s236 + $0x8] sm:$0xff]
        %v270 = vld [vmem:[%s236 + $0x10] sm:$0xff]
        %v271 = vld [vmem:[%s236 + $0x18] sm:$0xff]
        %v272 = vld [vmem:[%s2] sm:$0xff]
        %v273 = vld [vmem:[%s2 + $0x8] sm:$0xff]
        %275 = vset.pattern.permute.xlu0 0
        %276 = vperm.xlu0 %275, %v272
        %v277 = vpop.permute.xlu0 %276
        %280 = vset.pattern.permute.xlu0 0
        %281 = vperm.xlu0 %280, %v273
        %v282 = vpop.permute.xlu0 %281
        %vm284 = vcmask 130048
        %v286 = vsel %vm284, %v266, 0
        %v289 = vsel %vm284, %v267, 0
        %291 = vmatpush.msra.mxu0 0.0
        %292 = vmatpush.msra.mxu0 0.0
        %293 = vmatpush.msra.mxu0 0.0
        %294 = vmatpush.msra.mxu0 0.0
        %295 = vmatpush.msra.mxu0 0.0
        %296 = vmatpush.msra.mxu0 0.0
        %297 = vmatpush.msra.mxu0 0.0
        %298 = vmatpush.msra.mxu0 0.0
        %299 = vmatpush.msra.mxu0 0.0
        %300 = vmatpush.msra.mxu0 0.0
        %301 = vmatpush.msra.mxu0 0.0
        %302 = vmatpush.msra.mxu0 0.0
        %303 = vmatpush.msra.mxu0 0.0
        %304 = vmatpush.msra.mxu0 0.0
        %305 = vmatpush.msra.mxu0 %v270
        %306 = vmatpush.msra.mxu0 %v268
        %307 = vmatmul.f32.gmra.mxu0 %v286
        %v308 = vpop.f32.mrf.mxu0
        %v309 = vadd.f32 %v277, %v308
        %310 = vmatmul.f32.gmra.mxu0 %v289
        %v311 = vpop.f32.mrf.mxu0
        %v312 = vadd.f32 %v282, %v311
        %313 = vdwg.mxu0
        %314 = vmatpush.msra.mxu0 0.0
        %315 = vmatpush.msra.mxu0 0.0
        %316 = vmatpush.msra.mxu0 0.0
        %317 = vmatpush.msra.mxu0 0.0
        %318 = vmatpush.msra.mxu0 0.0
        %319 = vmatpush.msra.mxu0 0.0
        %320 = vmatpush.msra.mxu0 0.0
        %321 = vmatpush.msra.mxu0 0.0
        %322 = vmatpush.msra.mxu0 0.0
        %323 = vmatpush.msra.mxu0 0.0
        %324 = vmatpush.msra.mxu0 0.0
        %325 = vmatpush.msra.mxu0 0.0
        %326 = vmatpush.msra.mxu0 0.0
        %327 = vmatpush.msra.mxu0 0.0
        %328 = vmatpush.msra.mxu0 %v271
        %329 = vmatpush.msra.mxu0 %v269
        %330 = vmatmul.f32.gmra.mxu0 %v286
        %v331 = vpop.f32.mrf.mxu0
        %v332 = vadd.f32 %v277, %v331
        %333 = vmatmul.f32.gmra.mxu0 %v289
        %v334 = vpop.f32.mrf.mxu0
        %v335 = vadd.f32 %v282, %v334
        %336 = vdwg.mxu0
        %v337 = vmax.f32 %v309, 0.0
        %v338 = vmax.f32 %v332, 0.0
        %v339 = vmax.f32 %v312, 0.0
        %v340 = vmax.f32 %v335, 0.0
        %v341 = vld [vmem:[%s3] sm:$0x1]
        %s342 = sld [smem:[#allocation2]]
        %v343 = vstv %s342
        %v345 = vsel %vm284, %v341, 0
        %347 = vmatpush.msra.mxu0 0.0
        %348 = vmatpush.msra.mxu0 0.0
        %349 = vmatpush.msra.mxu0 0.0
        %350 = vmatpush.msra.mxu0 0.0
        %351 = vmatpush.msra.mxu0 0.0
        %352 = vmatpush.msra.mxu0 0.0
        %353 = vmatpush.msra.mxu0 0.0
        %354 = vmatpush.msra.mxu0 0.0
        %355 = vmatpush.msra.mxu0 0.0
        %356 = vmatpush.msra.mxu0 0.0
        %357 = vmatpush.msra.mxu0 0.0
        %358 = vmatpush.msra.mxu0 0.0
        %359 = vmatpush.msra.mxu0 0.0
        %360 = vmatpush.msra.mxu0 0.0
        %361 = vmatpush.msra.mxu0 %v339
        %362 = vmatpush.msra.mxu0 %v337
        %363 = vmatmul.f32.gmra.mxu0 %v345
        %v364 = vpop.f32.mrf.mxu0
        %v365 = vadd.f32 %v343, %v364
        %366 = vdwg.mxu0
        %367 = vmatpush.msra.mxu0 0.0
        %368 = vmatpush.msra.mxu0 0.0
        %369 = vmatpush.msra.mxu0 0.0
        %370 = vmatpush.msra.mxu0 0.0
        %371 = vmatpush.msra.mxu0 0.0
        %372 = vmatpush.msra.mxu0 0.0
        %373 = vmatpush.msra.mxu0 0.0
        %374 = vmatpush.msra.mxu0 0.0
        %375 = vmatpush.msra.mxu0 0.0
        %376 = vmatpush.msra.mxu0 0.0
        %377 = vmatpush.msra.mxu0 0.0
        %378 = vmatpush.msra.mxu0 0.0
        %379 = vmatpush.msra.mxu0 0.0
        %380 = vmatpush.msra.mxu0 0.0
        %381 = vmatpush.msra.mxu0 %v340
        %382 = vmatpush.msra.mxu0 %v338
        %383 = vmatmul.f32.gmra.mxu0 %v345
        %v384 = vpop.f32.mrf.mxu0
        %v385 = vadd.f32 %v343, %v384
        %386 = vdwg.mxu0
        %v387 = vsub.f32 0.0, %v365
        %v388 = vsub.f32 0.0, %v385
        %v389 = vmul.f32 %v387, 1.442695
        %v390 = vpow.pop %v389
        %v391 = vmul.f32 %v388, 1.442695
        %v392 = vpow.pop %v391
        %v393 = vadd.f32 %v390, 1.0
        %v394 = vadd.f32 %v392, 1.0
        %v395 = vrcp.pop %v393
        %v396 = vmul.f32 %v393, %v395
        %v397 = vsub.f32 1.0, %v396
        %v398 = vmul.f32 %v395, %v397
        %v399 = vadd.f32 %v395, %v398
        %vm400 = vweird.f32 %v393
        %vm401 = vweird.f32 %v395
        %vm402 = vmor %vm400, %vm401
        %v403 = vsel %vm402, %v395, %v399
        %v404 = vand.u32 2147483647, %v393
        %vm405 = vcmp.eq.f32.partialorder %v404, 8.507059e+37
        %v406 = vand.u32 %v393, 2147483648
        %v407 = vor.u32 1.1754944e-38, %v406
        %v408 = vsel %vm405, %v407, %v403
        %v409 = vmul.f32 1.0, %v408
        %v410 = vrcp.pop %v394
        %v411 = vmul.f32 %v394, %v410
        %v412 = vsub.f32 1.0, %v411
        %v413 = vmul.f32 %v410, %v412
        %v414 = vadd.f32 %v410, %v413
        %vm415 = vweird.f32 %v394
        %vm416 = vweird.f32 %v410
        %vm417 = vmor %vm415, %vm416
        %v418 = vsel %vm417, %v410, %v414
        %v419 = vand.u32 2147483647, %v394
        %vm420 = vcmp.eq.f32.partialorder %v419, 8.507059e+37
        %v421 = vand.u32 %v394, 2147483648
        %v422 = vor.u32 1.1754944e-38, %v421
        %v423 = vsel %vm420, %v422, %v418
        %v424 = vmul.f32 1.0, %v423
        %v427 = vrot.slane %v424, 7
        %vm428 = vcmask 1040384
        %v429 = vsel %vm428, %v409, %v427
        %v431 = vlaneseq
        %vm432 = vcmp.ge.s32.totalorder %v431, 0
        %vm433 = vcmp.lt.s32.totalorder %v431, 256
        %vm434 = vmand %vm432, %vm433
        %435 = vst.msk [vmem:[%s263] sm:$0x3] %vm434, %v429
        %s436 = sand.u32 %s157, 1
        %s437 = scalar_lea.sflag [#allocation5], %s436
        %s438 = sand.u32 %s157, 1
        %s439 = smul.addr %s438, 2
        %s440 = scalar_lea.vmem [#allocation6], %s439
        // Predicated region
        $region45: #{tpu_custom_call.1} parent=39 // pred_check
          %p441 = pneg %p167
        $region46: #{tpu_custom_call.1} parent=39 // pred_check_branch
          %443 = sbr.rel (%p441) target = $region48
        $region47: #{tpu_custom_call.1} parent=39 // pred_region
          %s444 = smul.u32 2, %s28
          %446 = vsyncadd %s437, 0
          %s447 = smul.addr %s27, 2
          %s448 = sadd.s32 %s444, %s447
          %s449 = scalar_lea.hbm %s5, %s448
          %s451 = sshll.u32 %s440, 4
          %s452 = int_to_ptr.vmem [resolvable:$true] %s451
          %s453 = sshll.u32 %s449, 4
          %s454 = int_to_ptr.hbm [resolvable:$true] %s453
          %456 = dma.vmem_to_hbm [thread:$0]  %s452, 32, %s454, %s437
        $region48: #{tpu_custom_call.1} parent=39 // pred_fallthru
          _
      $region40: #{tpu_custom_call.1} parent=5 // pred_fallthru
        _
      %p457 = scmp.le.s32.totalorder 2, %s18
      // Predicated region
      $region49: #{tpu_custom_call.1} parent=5 // pred_check
        %p458 = pneg %p457
      $region50: #{tpu_custom_call.1} parent=5 // pred_check_branch
        %460 = sbr.rel (%p458) target = $region52
      $region51: #{tpu_custom_call.1} parent=5 // pred_region
        %s461 = ssub.s32 %s18, 2
        // Predicated region
        $region53: #{tpu_custom_call.1} parent=51 // pred_check
          %p462 = pneg %p173
        $region54: #{tpu_custom_call.1} parent=51 // pred_check_branch
          %464 = sbr.rel (%p462) target = $region56
        $region55: #{tpu_custom_call.1} parent=51 // pred_region
          %s465 = sand.u32 %s158, 1
          %s466 = scalar_lea.sflag [#allocation5], %s465
          %s467 = sand.u32 %s158, 1
          %s468 = smul.addr %s467, 2
          %s469 = scalar_lea.vmem [#allocation6], %s468
          %471 = dma.done %s466, 32
        $region56: #{tpu_custom_call.1} parent=51 // pred_fallthru
          _
      $region52: #{tpu_custom_call.1} parent=5 // pred_fallthru
        _
    $region6: #{tpu_custom_call.1} parent=1 // loop_footer
      %s22 = sadd.s32 1, %s18
    $region7: #{tpu_custom_call.1} parent=1 // loop_footer_branch
      %17 = sbr.rel target = $region3
    $region8: #{tpu_custom_call.1} parent=1 // loop_exit
      _
    %472 = vsyncpa [#allocation4], 1
    %s473 = scalar_lea.sflag [#allocation4], 1
    %474 = vsyncpa %s473, 1
    %475 = vsyncpa [#allocation5], 1
    %s476 = scalar_lea.sflag [#allocation5], 1
    %477 = vsyncpa %s476, 1

</llo_original>
